<compile_context>
chip_gen: v6e
topology: v6e:2x2x1
jax: 0.10.0
libtpu: 0.0.40
codegen_flags: <defaults>
</compile_context>

<pallas_src>
import functools

import numpy as np
import jax
import jax.numpy as jnp
from jax import lax
from jax.experimental import pallas as pl
from jax.experimental.pallas import tpu as pltpu


def _image_mix_kernel(perm_ref, w_ref, x_ref, xp_ref, o_ref):
    """out = (1 - w) * x + w * x_perm  (w broadcast over channels).

    perm_ref : SMEM int32 (B,) scalar-prefetch permutation (used only by the
               index_maps; unused in the body).
    w_ref    : VMEM (1, 1, HW) weight of the permuted copy for this row
               (constant 1-mixup_lam for mixup rows, {0,1} box mask for cutmix).
    x_ref, xp_ref, o_ref : VMEM (1, C, HW).
    """
    del perm_ref
    w = w_ref[...]
    x = x_ref[...]
    xp = xp_ref[...]
    o_ref[...] = (1.0 - w) * x + w * xp


def _label_mix_kernel(bs, lam_ref, lab_ref, labp_ref, o_ref):
    """Per-row label blend: rows < bs use mixup_lam, rows >= bs use cutmix_lam."""
    B, NC = lab_ref.shape
    row = lax.broadcasted_iota(jnp.int32, (B, NC), 0)
    lamv = jnp.where(row < bs, lam_ref[0], lam_ref[1])
    o_ref[...] = lamv * lab_ref[...] + (1.0 - lamv) * labp_ref[...]


@jax.jit
def _apply_mixup_cutmix(images, labels_1h, perm, box, lams):
    """Device-side hot path. `perm`, `box`, `lams` are runtime arrays."""
    B, C, H, W = images.shape
    bs = B // 2
    HW = H * W
    x = images.astype(jnp.float32).reshape(B, C, HW)

    # --- CutMix box mask, computed once on (H, W) only, flattened lane-dense ---
    bbx1, bbx2, bby1, bby2 = box[0], box[1], box[2], box[3]
    hh = jnp.arange(H, dtype=jnp.int32)[:, None]      # axis 2 (torch size(-2))
    ww = jnp.arange(W, dtype=jnp.int32)[None, :]      # axis 3 (torch size(-1))
    in_box = (hh >= bbx1) & (hh < bbx2) & (ww >= bby1) & (ww < bby2)
    cutmix_w = in_box.reshape(1, HW).astype(jnp.float32)          # (1, HW)
    mixup_w = jnp.full((1, HW), 1.0, jnp.float32) - lams[0]       # (1, HW)
    w_table = jnp.stack([mixup_w, cutmix_w], axis=0)              # (2, 1, HW)

    # --- Gridded, pipelined image kernel: one row per step, permuted partner
    #     gathered from HBM via the scalar-prefetched permutation. ---
    grid_spec = pltpu.PrefetchScalarGridSpec(
        num_scalar_prefetch=1,
        grid=(B,),
        in_specs=[
            # weight block: row 0 for mixup half, row 1 for cutmix half
            pl.BlockSpec((1, 1, HW),
                         lambda i, p: (jnp.where(i >= bs, 1, 0), 0, 0)),
            # original row i
            pl.BlockSpec((1, C, HW), lambda i, p: (i, 0, 0)),
            # permuted partner row (gather happens in the DMA, not on host)
            pl.BlockSpec((1, C, HW), lambda i, p: (p[i], 0, 0)),
        ],
        out_specs=pl.BlockSpec((1, C, HW), lambda i, p: (i, 0, 0)),
    )
    out_flat = pl.pallas_call(
        _image_mix_kernel,
        out_shape=jax.ShapeDtypeStruct((B, C, HW), jnp.float32),
        grid_spec=grid_spec,
        compiler_params=pltpu.CompilerParams(
            dimension_semantics=("parallel",)),
    )(perm, w_table, x, x)

    # --- Tiny label kernel (labels are negligible traffic). ---
    labels_perm = labels_1h[perm]
    out_labels = pl.pallas_call(
        functools.partial(_label_mix_kernel, bs),
        out_shape=jax.ShapeDtypeStruct(labels_1h.shape, jnp.float32),
        in_specs=[
            pl.BlockSpec(memory_space=pltpu.SMEM),                 # (2,) lambdas
            pl.BlockSpec(memory_space=pltpu.MemorySpace.VMEM),     # labels
            pl.BlockSpec(memory_space=pltpu.MemorySpace.VMEM),     # labels_perm
        ],
        out_specs=pl.BlockSpec(memory_space=pltpu.MemorySpace.VMEM),
    )(lams, labels_1h, labels_perm)

    return out_flat.reshape(B, C, H, W), out_labels


def random_mixup_cutmix(images, labels, num_classes,
                        mixup_alpha=0.2, cutmix_alpha=1.0,
                        is_mixmatch=False, seed=0):
    """JAX/Pallas equivalent of RandomMixupCutMix.forward.

    images: (B, C, H, W), labels: (B,) int or (B, num_classes).
    Returns (mixed_images, mixed_labels, [mixup_lam, cutmix_lam], index).
    """
    # TODO(synk): host numpy RNG (beta / randint / randperm) mirrors the torch
    # module's np.random/torch.randperm usage; it has no in-kernel equivalent
    # needed here since only the resulting scalars/permutation reach the device.
    rng = np.random.default_rng(seed)
    B = images.shape[0]
    bs = B // 2

    if labels.ndim == 1:
        labels_1h = jax.nn.one_hot(labels, num_classes, dtype=jnp.float32)
    else:
        labels_1h = labels.astype(jnp.float32)

    # ---------------- Mixup parameters -----------------------------------------
    mixup_lam = float(rng.beta(mixup_alpha, mixup_alpha)) if mixup_alpha > 0 else 1.0
    if is_mixmatch:
        mixup_lam = max(mixup_lam, 1.0 - mixup_lam)
    mixup_index = rng.permutation(bs).astype(np.int32)

    # ---------------- CutMix parameters (torch: W=size(-2), H=size(-1)) --------
    cutmix_lam = float(rng.beta(cutmix_alpha, cutmix_alpha)) if cutmix_alpha > 0 else 1.0
    if is_mixmatch:
        cutmix_lam = max(cutmix_lam, 1.0 - cutmix_lam)
    W_t, H_t = images.shape[-2], images.shape[-1]
    cut_rat = np.sqrt(1.0 - cutmix_lam)
    cut_w = int(W_t * cut_rat)
    cut_h = int(H_t * cut_rat)
    cx = int(rng.integers(W_t))
    cy = int(rng.integers(H_t))
    bbx1 = int(np.clip(cx - cut_w // 2, 0, W_t))
    bby1 = int(np.clip(cy - cut_h // 2, 0, H_t))
    bbx2 = int(np.clip(cx + cut_w // 2, 0, W_t))
    bby2 = int(np.clip(cy + cut_h // 2, 0, H_t))
    cutmix_index = rng.permutation(B - bs).astype(np.int32)
    cutmix_lam = 1.0 - (bbx2 - bbx1) * (bby2 - bby1) / float(W_t * H_t)

    # ---------------- Runtime device parameters (no retrace across calls) ------
    perm_full = np.concatenate([mixup_index, bs + cutmix_index]).astype(np.int32)
    perm = jnp.asarray(perm_full)
    box = jnp.array([bbx1, bbx2, bby1, bby2], dtype=jnp.int32)
    lams = jnp.array([mixup_lam, cutmix_lam], dtype=jnp.float32)

    mixed_images, mixed_labels = _apply_mixup_cutmix(
        images, labels_1h, perm, box, lams)
    index = jnp.concatenate([jnp.asarray(mixup_index),
                             jnp.asarray(cutmix_index)], axis=0)
    return mixed_images, mixed_labels, [mixup_lam, cutmix_lam], index


def _reference(images, labels_1h, mixup_lam, cutmix_lam,
               mixup_index, cutmix_index, box):
    """Pure-JAX reference matching the PyTorch semantics."""
    B = images.shape[0]
    bs = B // 2
    bbx1, bbx2, bby1, bby2 = box
    img1 = images[:bs]
    img2 = images[bs:]
    img1_mix = mixup_lam * img1 + (1.0 - mixup_lam) * img1[mixup_index]
    img2_mix = img2.at[:, :, bbx1:bbx2, bby1:bby2].set(
        img2[cutmix_index][:, :, bbx1:bbx2, bby1:bby2])
    lab1 = labels_1h[:bs]
    lab2 = labels_1h[bs:]
    lab1_mix = mixup_lam * lab1 + (1.0 - mixup_lam) * lab1[mixup_index]
    lab2_mix = cutmix_lam * lab2 + (1.0 - cutmix_lam) * lab2[cutmix_index]
    return (jnp.concatenate([img1_mix, img2_mix], 0),
            jnp.concatenate([lab1_mix, lab2_mix], 0))


if __name__ == "__main__":
    B, C, H, W = 4, 4, 16, 16
    NUM_CLASSES = 8

    key = jax.random.PRNGKey(0)
    k_img, k_lab = jax.random.split(key)
    images = jax.random.normal(k_img, (B, C, H, W), dtype=jnp.float32)
    labels = jax.random.randint(k_lab, (B,), 0, NUM_CLASSES, dtype=jnp.int32)

    out_images, out_labels, lams, index = random_mixup_cutmix(
        images, labels, NUM_CLASSES, mixup_alpha=0.2, cutmix_alpha=1.0, seed=0)
    jax.block_until_ready((out_images, out_labels))

    # Re-derive the same random parameters to check against a pure-JAX reference.
    rng = np.random.default_rng(0)
    bs = B // 2
    mixup_lam = float(rng.beta(0.2, 0.2))
    mixup_index = rng.permutation(bs).astype(np.int32)
    cutmix_lam0 = float(rng.beta(1.0, 1.0))
    W_t, H_t = images.shape[-2], images.shape[-1]
    cut_rat = np.sqrt(1.0 - cutmix_lam0)
    cut_w = int(W_t * cut_rat)
    cut_h = int(H_t * cut_rat)
    cx = int(rng.integers(W_t))
    cy = int(rng.integers(H_t))
    bbx1 = int(np.clip(cx - cut_w // 2, 0, W_t))
    bby1 = int(np.clip(cy - cut_h // 2, 0, H_t))
    bbx2 = int(np.clip(cx + cut_w // 2, 0, W_t))
    bby2 = int(np.clip(cy + cut_h // 2, 0, H_t))
    cutmix_index = rng.permutation(B - bs).astype(np.int32)
    cutmix_lam = 1.0 - (bbx2 - bbx1) * (bby2 - bby1) / float(W_t * H_t)

    labels_1h = jax.nn.one_hot(labels, NUM_CLASSES, dtype=jnp.float32)
    ref_images, ref_labels = _reference(
        images, labels_1h, mixup_lam, cutmix_lam,
        mixup_index, cutmix_index, (bbx1, bbx2, bby1, bby2))

    assert np.allclose(np.asarray(out_images), np.asarray(ref_images),
                       rtol=1e-5, atol=1e-5)
    assert np.allclose(np.asarray(out_labels), np.asarray(ref_labels),
                       rtol=1e-5, atol=1e-5)
    print("KERNEL_OK")
</pallas_src>

<mosaic_0001>
module attributes {stable_mosaic.version = 11 : i64} {
  func.func @_image_mix_kernel(%arg0: i32, %arg1: memref<4xi32, #tpu.memory_space<smem>>, %arg2: memref<1x1x256xf32, #tpu.memory_space<vmem>>, %arg3: memref<1x4x256xf32, #tpu.memory_space<vmem>>, %arg4: memref<1x4x256xf32, #tpu.memory_space<vmem>>, %arg5: memref<1x4x256xf32, #tpu.memory_space<vmem>>) attributes {dimension_semantics = [#tpu.dimension_semantics<parallel>], iteration_bounds = array<i64: 4>, scalar_prefetch = 1 : i64, scratch_operands = 0 : i64, tpu.core_type = #tpu.core_type<tc>, window_params = [{transform_indices = @transform_0, window_bounds = array<i64: 1, 1, 256>}, {transform_indices = @transform_1, window_bounds = array<i64: 1, 4, 256>}, {transform_indices = @transform_2, window_bounds = array<i64: 1, 4, 256>}, {transform_indices = @transform_3, window_bounds = array<i64: 1, 4, 256>}]} {
    %c0 = arith.constant 0 : index
    %c0_0 = arith.constant 0 : index
    %c0_1 = arith.constant 0 : index
    %0 = vector.load %arg2[%c0, %c0_0, %c0_1] : memref<1x1x256xf32, #tpu.memory_space<vmem>>, vector<1x1x256xf32>
    %c0_2 = arith.constant 0 : index
    %c0_3 = arith.constant 0 : index
    %c0_4 = arith.constant 0 : index
    %1 = vector.load %arg3[%c0_2, %c0_3, %c0_4] : memref<1x4x256xf32, #tpu.memory_space<vmem>>, vector<1x4x256xf32>
    %c0_5 = arith.constant 0 : index
    %c0_6 = arith.constant 0 : index
    %c0_7 = arith.constant 0 : index
    %2 = vector.load %arg4[%c0_5, %c0_6, %c0_7] : memref<1x4x256xf32, #tpu.memory_space<vmem>>, vector<1x4x256xf32>
    %cst = arith.constant 1.000000e+00 : f32
    %3 = vector.broadcast %cst : f32 to vector<1x1x256xf32>
    %4 = arith.subf %3, %0 : vector<1x1x256xf32>
    %5 = vector.broadcast %4 : vector<1x1x256xf32> to vector<1x4x256xf32>
    %6 = arith.mulf %5, %1 : vector<1x4x256xf32>
    %7 = vector.broadcast %0 : vector<1x1x256xf32> to vector<1x4x256xf32>
    %8 = arith.mulf %7, %2 : vector<1x4x256xf32>
    %9 = arith.addf %6, %8 : vector<1x4x256xf32>
    %c0_8 = arith.constant 0 : index
    %c0_9 = arith.constant 0 : index
    %c0_10 = arith.constant 0 : index
    %10 = vector.load %arg5[%c0_8, %c0_9, %c0_10] : memref<1x4x256xf32, #tpu.memory_space<vmem>>, vector<1x4x256xf32>
    tpu.vector_store %arg5[%c0_8, %c0_9, %c0_10], %9 {strides = array<i32>} : memref<1x4x256xf32, #tpu.memory_space<vmem>>, vector<1x4x256xf32>,
    return
  }
  func.func @transform_0(%arg0: i32, %arg1: memref<4xi32, #tpu.memory_space<smem>>) -> (i32, i32, i32) {
    %c2_i32 = arith.constant 2 : i32
    %0 = arith.cmpi sge, %arg0, %c2_i32 : i32
    %c1_i32 = arith.constant 1 : i32
    %c0_i32 = arith.constant 0 : i32
    %1 = arith.select %0, %c1_i32, %c0_i32 : i32
    %c0_i32_0 = arith.constant 0 : i32
    %c0_i32_1 = arith.constant 0 : i32
    %c0_i32_2 = arith.constant 0 : i32
    return %1, %c0_i32_0, %c0_i32_1 : i32, i32, i32
  }
  func.func @transform_1(%arg0: i32, %arg1: memref<4xi32, #tpu.memory_space<smem>>) -> (i32, i32, i32) {
    %c0_i32 = arith.constant 0 : i32
    %c0_i32_0 = arith.constant 0 : i32
    %c0_i32_1 = arith.constant 0 : i32
    return %arg0, %c0_i32, %c0_i32_0 : i32, i32, i32
  }
  func.func @transform_2(%arg0: i32, %arg1: memref<4xi32, #tpu.memory_space<smem>>) -> (i32, i32, i32) {
    %0 = arith.index_cast %arg0 : i32 to index
    %1 = memref.load %arg1[%0] : memref<4xi32, #tpu.memory_space<smem>>
    %c0_i32 = arith.constant 0 : i32
    %c0_i32_0 = arith.constant 0 : i32
    %c0_i32_1 = arith.constant 0 : i32
    return %1, %c0_i32, %c0_i32_0 : i32, i32, i32
  }
  func.func @transform_3(%arg0: i32, %arg1: memref<4xi32, #tpu.memory_space<smem>>) -> (i32, i32, i32) {
    %c0_i32 = arith.constant 0 : i32
    %c0_i32_0 = arith.constant 0 : i32
    %c0_i32_1 = arith.constant 0 : i32
    return %arg0, %c0_i32, %c0_i32_0 : i32, i32, i32
  }
}

module attributes {stable_mosaic.version = 11 : i64} {
  func.func @_label_mix_kernel(%arg0: memref<2xf32, #tpu.memory_space<smem>>, %arg1: memref<4x8xf32, #tpu.memory_space<vmem>>, %arg2: memref<4x8xf32, #tpu.memory_space<vmem>>, %arg3: memref<4x8xf32, #tpu.memory_space<vmem>>) attributes {dimension_semantics = [], scalar_prefetch = 0 : i64, scratch_operands = 0 : i64, tpu.core_type = #tpu.core_type<tc>} {
    %0 = tpu.iota {dimensions = array<i32: 0>} : vector<4x8xi32>
    %c2_i32 = arith.constant 2 : i32
    %1 = vector.broadcast %c2_i32 : i32 to vector<4x8xi32>
    %2 = arith.cmpi slt, %0, %1 : vector<4x8xi32>
    %c0 = arith.constant 0 : index
    %3 = memref.load %arg0[%c0] : memref<2xf32, #tpu.memory_space<smem>>
    %c1 = arith.constant 1 : index
    %4 = memref.load %arg0[%c1] : memref<2xf32, #tpu.memory_space<smem>>
    %5 = vector.broadcast %3 : f32 to vector<4x8xf32>
    %6 = vector.broadcast %4 : f32 to vector<4x8xf32>
    %7 = arith.select %2, %5, %6 : vector<4x8xi1>, vector<4x8xf32>
    %c0_0 = arith.constant 0 : index
    %c0_1 = arith.constant 0 : index
    %8 = vector.load %arg1[%c0_0, %c0_1] : memref<4x8xf32, #tpu.memory_space<vmem>>, vector<4x8xf32>
    %9 = arith.mulf %7, %8 : vector<4x8xf32>
    %cst = arith.constant 1.000000e+00 : f32
    %10 = vector.broadcast %cst : f32 to vector<4x8xf32>
    %11 = arith.subf %10, %7 : vector<4x8xf32>
    %c0_2 = arith.constant 0 : index
    %c0_3 = arith.constant 0 : index
    %12 = vector.load %arg2[%c0_2, %c0_3] : memref<4x8xf32, #tpu.memory_space<vmem>>, vector<4x8xf32>
    %13 = arith.mulf %11, %12 : vector<4x8xf32>
    %14 = arith.addf %9, %13 : vector<4x8xf32>
    %c0_4 = arith.constant 0 : index
    %c0_5 = arith.constant 0 : index
    %15 = vector.load %arg3[%c0_4, %c0_5] : memref<4x8xf32, #tpu.memory_space<vmem>>, vector<4x8xf32>
    tpu.vector_store %arg3[%c0_4, %c0_5], %14 {strides = array<i32>} : memref<4x8xf32, #tpu.memory_space<vmem>>, vector<4x8xf32>,
    return
  }
}

</mosaic_0001>

<llo_original>
// kernel: _apply_mixup_cutmix.3
$region0: #{_apply_mixup_cutmix.3}
  #allocation0 [shape = 'u32[]', space=smem, size = 0x4, offset = 0x4, fixed_abs, tag = 'smem constant byte address 0x4 - core index']
  #allocation1 [shape = 'u32[144,128]{1,0:T(1,128)}', space=vmem, size = 0x12000, scoped, tag = 'internal scratch']
  %s0 = inlined_call_operand.vmem [shape: f32[2], index: 0, kind: input, shape index: {}]
  %s1 = inlined_call_operand.vmem [shape: f32[4,8], index: 1, kind: input, shape index: {}]
  %s2 = inlined_call_operand.vmem [shape: f32[4,8], index: 2, kind: input, shape index: {}]
  %s3 = inlined_call_operand.hbm [shape: f32[4,8], index: 3, kind: output, shape index: {}]
  %s4 = sld [smem:[#allocation0]]
  $region26: #{_apply_mixup_cutmix.3} parent=0
    _
  %s6 = ssub.s32 1, %s4
  %s7 = scalar_select 0, %s6, %s4
  $region1: #{_apply_mixup_cutmix.3} parent=0
    #allocation2 [shape = 'u8[512]{0}', space=smem, size = 0x200, scoped, tag = 'input window, operand 0, single buffered']
    #allocation3 [shape = 's32[1]{0}', space=sflag, size = 0x4, scoped, tag = 'scoped memory for _apply_mixup_cutmix.3']
    #allocation4 [shape = 's32[1]{0}', space=sflag, size = 0x4, scoped, tag = 'scoped memory for _apply_mixup_cutmix.3']
    #allocation5 [shape = 'u8[2048]{0}', space=vmem, size = 0x800, scoped, tag = 'output window, operand 0, single buffered']
    %8 = vsyncpa [#allocation4], 0
    %9 = vsyncpa [#allocation3], 0
    // Predicated region
    $region2: #{_apply_mixup_cutmix.3} parent=1 // pred_check
      _
    $region3: #{_apply_mixup_cutmix.3} parent=1 // pred_check_branch
      %11 = sbr.rel (0) target = $region5
    $region4: #{_apply_mixup_cutmix.3} parent=1 // pred_region
      %s13 = ssub.s32 16, 16
      %14 = vsyncadd [#allocation4], %s13
      %s16 = sshll.u32 %s0, 4
      %s17 = int_to_ptr.vmem [resolvable:$true] %s16
      %19 = dma.vmem_to_smem %s17, 16, [#allocation2], [#allocation4]
    $region5: #{_apply_mixup_cutmix.3} parent=1 // pred_fallthru
      _
    // Predicated region
    $region6: #{_apply_mixup_cutmix.3} parent=1 // pred_check
      _
    $region7: #{_apply_mixup_cutmix.3} parent=1 // pred_check_branch
      %21 = sbr.rel (0) target = $region9
    $region8: #{_apply_mixup_cutmix.3} parent=1 // pred_region
      _
    $region9: #{_apply_mixup_cutmix.3} parent=1 // pred_fallthru
      _
    // Predicated region
    $region10: #{_apply_mixup_cutmix.3} parent=1 // pred_check
      _
    $region11: #{_apply_mixup_cutmix.3} parent=1 // pred_check_branch
      %23 = sbr.rel (0) target = $region13
    $region12: #{_apply_mixup_cutmix.3} parent=1 // pred_region
      _
    $region13: #{_apply_mixup_cutmix.3} parent=1 // pred_fallthru
      _
    // Predicated region
    $region14: #{_apply_mixup_cutmix.3} parent=1 // pred_check
      _
    $region15: #{_apply_mixup_cutmix.3} parent=1 // pred_check_branch
      %25 = sbr.rel (0) target = $region17
    $region16: #{_apply_mixup_cutmix.3} parent=1 // pred_region
      %26 = dma.done [#allocation4], 16
    $region17: #{_apply_mixup_cutmix.3} parent=1 // pred_fallthru
      _
    %27 = sfence
    %v28 = vlaneseq
    %v29 = vshrl.u32 %v28, 7
    %vm30 = vcmp.lt.s32.totalorder %v29, 2
    %s31 = sld [smem:[#allocation2]]
    %s32 = sld [smem:[#allocation2 + $0x1]]
    %v33 = vstv %s31
    %v34 = vstv %s32
    %v35 = vsel %vm30, %v33, %v34
    %v36 = vld [vmem:[%s1] sm:$0xf]
    %v37 = vmul.f32 %v35, %v36
    %v38 = vsub.f32 1.0, %v35
    %v39 = vld [vmem:[%s2] sm:$0xf]
    %v40 = vmul.f32 %v38, %v39
    %v41 = vadd.f32 %v37, %v40
    %vm42 = vcmask 60416
    %43 = vst.msk [vmem:[#allocation5] sm:$0xf] %vm42, %v41
    // Predicated region
    $region18: #{_apply_mixup_cutmix.3} parent=1 // pred_check
      _
    $region19: #{_apply_mixup_cutmix.3} parent=1 // pred_check_branch
      %45 = sbr.rel (0) target = $region21
    $region20: #{_apply_mixup_cutmix.3} parent=1 // pred_region
      %s47 = ssub.s32 64, 64
      %48 = vsyncadd [#allocation3], %s47
      %s50 = sshll.u32 [#allocation5], 4
      %s51 = int_to_ptr.vmem [resolvable:$true] %s50
      %53 = dma.vmem_to_hbm [thread:$0]  %s51, 64, %s3, [#allocation3]
    $region21: #{_apply_mixup_cutmix.3} parent=1 // pred_fallthru
      _
    // Predicated region
    $region22: #{_apply_mixup_cutmix.3} parent=1 // pred_check
      _
    $region23: #{_apply_mixup_cutmix.3} parent=1 // pred_check_branch
      %55 = sbr.rel (0) target = $region25
    $region24: #{_apply_mixup_cutmix.3} parent=1 // pred_region
      %56 = dma.done [#allocation3], 64
    $region25: #{_apply_mixup_cutmix.3} parent=1 // pred_fallthru
      _
    %57 = vsyncpa [#allocation3], 1
    %58 = vsyncpa [#allocation4], 1

// kernel: _apply_mixup_cutmix.2
$region0: #{_apply_mixup_cutmix.2}
  #allocation0 [shape = 'u32[]', space=smem, size = 0x4, offset = 0x4, fixed_abs, tag = 'smem constant byte address 0x4 - core index']
  #allocation1 [shape = 'u32[144,128]{1,0:T(1,128)}', space=vmem, size = 0x12000, scoped, tag = 'internal scratch']
  #allocation2 [shape = 's32[1]{0}', space=sflag, size = 0x4, scoped, tag = 'scoped memory for _apply_mixup_cutmix.2']
  #allocation3 [shape = 'u8[512]{0}', space=smem, size = 0x200, scoped, tag = 'prefetched SMEM operand 0']
  %s0 = inlined_call_operand.vmem [shape: s32[4], index: 0, kind: input, shape index: {}]
  %s1 = inlined_call_operand.vmem [shape: f32[2,1,256], index: 1, kind: input, shape index: {}]
  %s2 = inlined_call_operand.vmem [shape: f32[4,4,256], index: 2, kind: input, shape index: {}, may-alias: {2,3}]
  %s3 = inlined_call_operand.vmem [shape: f32[4,4,256], index: 3, kind: input, shape index: {}, may-alias: {2,3}]
  %s4 = inlined_call_operand.vmem [shape: f32[4,4,256], index: 4, kind: output, shape index: {}]
  %s5 = sld [smem:[#allocation0]]
  $region45: #{_apply_mixup_cutmix.2} parent=0
    _
  %s7 = ssub.s32 1, %s5
  %s8 = scalar_select 0, %s7, %s5
  %s9 = sshll.u32 %s0, 4
  %s10 = int_to_ptr.vmem [resolvable:$true] %s9
  %12 = dma.vmem_to_smem %s10, 16, [#allocation3], [#allocation2]
  %13 = dma.done [#allocation2], 16
  %14 = sfence
  loop: start=0, step=1, limit=6
  $region2: #{_apply_mixup_cutmix.2} parent=0 // loop_pre_header
    _
  $region3: #{_apply_mixup_cutmix.2} parent=0 // loop_header
    %s16 = sphi 0, %s20
    %p17 = scmp.ge.s32.totalorder %s16, 6
    %s30 = sphi 0, %s32
    %s33 = sphi 0, %s30
    %s34 = sphi 0, %s33
    %s50 = sphi 0, %s34
    %s56 = sphi 0, %s58
    %s59 = sphi 0, %s56
    %s60 = sphi 0, %s59
    %s76 = sphi 0, %s60
    %s84 = sphi 0, %s86
    %s87 = sphi 0, %s84
    %s88 = sphi 0, %s87
    %s104 = sphi 0, %s88
    %s110 = sphi 0, %s112
    %s113 = sphi 0, %s110
    %s114 = sphi 0, %s113
    %s130 = sphi 0, %s114
  $region4: #{_apply_mixup_cutmix.2} parent=0 // loop_header_branch
    %19 = sbr.rel (%p17) target = $region8
  $region5: #{_apply_mixup_cutmix.2} parent=0 // loop_body
    %s21 = ssub.s32 %s16, 1
    %s22 = ssub.s32 %s16, 2
    %s23 = sadd.s32 %s16, 1
    %p24 = scmp.ge.s32.totalorder %s16, 2
    %s25 = scalar_select %p24, 1, 0
    %p26 = scmp.ge.s32.totalorder %s23, 2
    %s27 = scalar_select %p26, 1, 0
    %s28 = ssub.s32 %s25, %s27
    %p29 = scmp.eq.s32.totalorder %s28, 0
    %s31 = sadd.s32 %s30, 1
    %s32 = scalar_select %p29, %s30, %s31
    %p35 = pneg %p29
    %p36 = scmp.eq.s32.totalorder %s16, 3
    %p37 = por %p35, %p36
    %p38 = scmp.ne.s32.totalorder %s30, %s33
    %p39 = scmp.eq.s32.totalorder %s16, 0
    %p40 = por %p38, %p39
    %p41 = scmp.ne.s32.totalorder %s30, %s33
    %p42 = scmp.eq.s32.totalorder %s21, 3
    %p43 = por %p41, %p42
    %p44 = scmp.ne.s32.totalorder %s33, %s34
    %p45 = scmp.eq.s32.totalorder %s21, 0
    %p46 = por %p44, %p45
    %p47 = scmp.ne.s32.totalorder %s33, %s34
    %p48 = scmp.eq.s32.totalorder %s22, 3
    %p49 = por %p47, %p48
    %p51 = scmp.ne.s32.totalorder %s34, %s50
    %p52 = scmp.eq.s32.totalorder %s22, 0
    %p53 = por %p51, %p52
    %s54 = ssub.s32 %s16, %s23
    %p55 = scmp.eq.s32.totalorder %s54, 0
    %s57 = sadd.s32 %s56, 1
    %s58 = scalar_select %p55, %s56, %s57
    %p61 = pneg %p55
    %p62 = scmp.eq.s32.totalorder %s16, 3
    %p63 = por %p61, %p62
    %p64 = scmp.ne.s32.totalorder %s56, %s59
    %p65 = scmp.eq.s32.totalorder %s16, 0
    %p66 = por %p64, %p65
    %p67 = scmp.ne.s32.totalorder %s56, %s59
    %p68 = scmp.eq.s32.totalorder %s21, 3
    %p69 = por %p67, %p68
    %p70 = scmp.ne.s32.totalorder %s59, %s60
    %p71 = scmp.eq.s32.totalorder %s21, 0
    %p72 = por %p70, %p71
    %p73 = scmp.ne.s32.totalorder %s59, %s60
    %p74 = scmp.eq.s32.totalorder %s22, 3
    %p75 = por %p73, %p74
    %p77 = scmp.ne.s32.totalorder %s60, %s76
    %p78 = scmp.eq.s32.totalorder %s22, 0
    %p79 = por %p77, %p78
    %s80 = sld [smem:[#allocation3 + %s16]]
    %s81 = sld [smem:[#allocation3 + %s23]]
    %s82 = ssub.s32 %s80, %s81
    %p83 = scmp.eq.s32.totalorder %s82, 0
    %s85 = sadd.s32 %s84, 1
    %s86 = scalar_select %p83, %s84, %s85
    %p89 = pneg %p83
    %p90 = scmp.eq.s32.totalorder %s16, 3
    %p91 = por %p89, %p90
    %p92 = scmp.ne.s32.totalorder %s84, %s87
    %p93 = scmp.eq.s32.totalorder %s16, 0
    %p94 = por %p92, %p93
    %p95 = scmp.ne.s32.totalorder %s84, %s87
    %p96 = scmp.eq.s32.totalorder %s21, 3
    %p97 = por %p95, %p96
    %p98 = scmp.ne.s32.totalorder %s87, %s88
    %p99 = scmp.eq.s32.totalorder %s21, 0
    %p100 = por %p98, %p99
    %p101 = scmp.ne.s32.totalorder %s87, %s88
    %p102 = scmp.eq.s32.totalorder %s22, 3
    %p103 = por %p101, %p102
    %p105 = scmp.ne.s32.totalorder %s88, %s104
    %p106 = scmp.eq.s32.totalorder %s22, 0
    %p107 = por %p105, %p106
    %s108 = ssub.s32 %s16, %s23
    %p109 = scmp.eq.s32.totalorder %s108, 0
    %s111 = sadd.s32 %s110, 1
    %s112 = scalar_select %p109, %s110, %s111
    %p115 = pneg %p109
    %p116 = scmp.eq.s32.totalorder %s16, 3
    %p117 = por %p115, %p116
    %p118 = scmp.ne.s32.totalorder %s110, %s113
    %p119 = scmp.eq.s32.totalorder %s16, 0
    %p120 = por %p118, %p119
    %p121 = scmp.ne.s32.totalorder %s110, %s113
    %p122 = scmp.eq.s32.totalorder %s21, 3
    %p123 = por %p121, %p122
    %p124 = scmp.ne.s32.totalorder %s113, %s114
    %p125 = scmp.eq.s32.totalorder %s21, 0
    %p126 = por %p124, %p125
    %p127 = scmp.ne.s32.totalorder %s113, %s114
    %p128 = scmp.eq.s32.totalorder %s22, 3
    %p129 = por %p127, %p128
    %p131 = scmp.ne.s32.totalorder %s114, %s130
    %p132 = scmp.eq.s32.totalorder %s22, 0
    %p133 = por %p131, %p132
    %p134 = scmp.le.s32.totalorder 1, %s16
    %p135 = scmp.lt.s32.totalorder %s16, 5
    %p136 = pnand %p134, %p135
    %p137 = pneg %p136
    // Predicated region
    $region9: #{_apply_mixup_cutmix.2} parent=5 // pred_check
      _
    $region10: #{_apply_mixup_cutmix.2} parent=5 // pred_check_branch
      %139 = sbr.rel (%p136) target = $region12
    $region11: #{_apply_mixup_cutmix.2} parent=5 // pred_region
      %s140 = ssub.s32 %s16, 1
    $region12: #{_apply_mixup_cutmix.2} parent=5 // pred_fallthru
      _
    %p141 = scmp.lt.s32.totalorder %s16, 4
    // Predicated region
    $region13: #{_apply_mixup_cutmix.2} parent=5 // pred_check
      %p142 = pneg %p141
    $region14: #{_apply_mixup_cutmix.2} parent=5 // pred_check_branch
      %144 = sbr.rel (%p142) target = $region16
    $region15: #{_apply_mixup_cutmix.2} parent=5 // pred_region
      // Predicated region
      $region17: #{_apply_mixup_cutmix.2} parent=15 // pred_check
        %p145 = pneg %p40
      $region18: #{_apply_mixup_cutmix.2} parent=15 // pred_check_branch
        %147 = sbr.rel (%p145) target = $region20
      $region19: #{_apply_mixup_cutmix.2} parent=15 // pred_region
        %p148 = scmp.ge.s32.totalorder %s16, 2
        %s149 = scalar_select %p148, 1, 0
        %p150 = scmp.lt.s32.totalorder %s149, 1
        %s151 = scalar_select %p150, %s149, 1
        %s152 = smul.addr %s151, 2
        %s153 = scalar_lea.vmem %s1, %s152
        %p154 = scmp.ge.s32.totalorder %s16, 2
        %s155 = scalar_select %p154, 1, 0
      $region20: #{_apply_mixup_cutmix.2} parent=15 // pred_fallthru
        _
      // Predicated region
      $region21: #{_apply_mixup_cutmix.2} parent=15 // pred_check
        %p156 = pneg %p66
      $region22: #{_apply_mixup_cutmix.2} parent=15 // pred_check_branch
        %158 = sbr.rel (%p156) target = $region24
      $region23: #{_apply_mixup_cutmix.2} parent=15 // pred_region
        %p159 = scmp.lt.s32.totalorder %s16, 3
        %s160 = scalar_select %p159, %s16, 3
        %s161 = smul.addr %s160, 2
        %s162 = smul.addr %s161, 4
        %s163 = scalar_lea.vmem %s2, %s162
      $region24: #{_apply_mixup_cutmix.2} parent=15 // pred_fallthru
        _
      // Predicated region
      $region25: #{_apply_mixup_cutmix.2} parent=15 // pred_check
        %p164 = pneg %p94
      $region26: #{_apply_mixup_cutmix.2} parent=15 // pred_check_branch
        %166 = sbr.rel (%p164) target = $region28
      $region27: #{_apply_mixup_cutmix.2} parent=15 // pred_region
        %s167 = sld [smem:[#allocation3 + %s16]]
        %p168 = scmp.lt.s32.totalorder %s167, 3
        %s169 = scalar_select %p168, %s167, 3
        %s170 = smul.addr %s169, 2
        %s171 = smul.addr %s170, 4
        %s172 = scalar_lea.vmem %s3, %s171
        %s173 = sld [smem:[#allocation3 + %s16]]
      $region28: #{_apply_mixup_cutmix.2} parent=15 // pred_fallthru
        _
    $region16: #{_apply_mixup_cutmix.2} parent=5 // pred_fallthru
      _
    %p174 = scmp.le.s32.totalorder 1, %s16
    %p175 = scmp.lt.s32.totalorder %s16, 5
    %p176 = pnand %p174, %p175
    %p177 = pneg %p176
    // Predicated region
    $region29: #{_apply_mixup_cutmix.2} parent=5 // pred_check
      _
    $region30: #{_apply_mixup_cutmix.2} parent=5 // pred_check_branch
      %179 = sbr.rel (%p176) target = $region32
    $region31: #{_apply_mixup_cutmix.2} parent=5 // pred_region
      %s180 = ssub.s32 %s16, 1
      %p181 = scmp.ge.s32.totalorder %s21, 2
      %s182 = scalar_select %p181, 1, 0
      %p183 = scmp.lt.s32.totalorder %s182, 1
      %s184 = scalar_select %p183, %s182, 1
      %s185 = smul.addr %s184, 2
      %s186 = scalar_lea.vmem %s1, %s185
      %p187 = pneg %p46
      %p188 = pneg %p43
      %p189 = scmp.lt.s32.totalorder %s21, 3
      %s190 = scalar_select %p189, %s21, 3
      %s191 = smul.addr %s190, 2
      %s192 = smul.addr %s191, 4
      %s193 = scalar_lea.vmem %s2, %s192
      %p194 = pneg %p72
      %p195 = pneg %p69
      %s196 = sld [smem:[#allocation3 + %s21]]
      %p197 = scmp.lt.s32.totalorder %s196, 3
      %s198 = scalar_select %p197, %s196, 3
      %s199 = smul.addr %s198, 2
      %s200 = smul.addr %s199, 4
      %s201 = scalar_lea.vmem %s3, %s200
      %p202 = pneg %p100
      %p203 = pneg %p97
      %p204 = pneg %p126
      %p205 = pneg %p123
      %p206 = scmp.lt.s32.totalorder %s21, 3
      %s207 = scalar_select %p206, %s21, 3
      %s208 = smul.addr %s207, 2
      %s209 = smul.addr %s208, 4
      %s210 = scalar_lea.vmem %s4, %s209
      %p211 = scmp.ge.s32.totalorder %s21, 2
      %s212 = scalar_select %p211, 1, 0
      %p213 = scmp.lt.s32.totalorder %s212, 1
      %s214 = scalar_select %p213, %s212, 1
      %s215 = smul.addr %s214, 2
      %s216 = scalar_lea.vmem %s1, %s215
      %p217 = scmp.ge.s32.totalorder %s21, 2
      %s218 = scalar_select %p217, 1, 0
      %p219 = scmp.lt.s32.totalorder %s21, 3
      %s220 = scalar_select %p219, %s21, 3
      %s221 = smul.addr %s220, 2
      %s222 = smul.addr %s221, 4
      %s223 = scalar_lea.vmem %s2, %s222
      %s224 = sld [smem:[#allocation3 + %s21]]
      %p225 = scmp.lt.s32.totalorder %s224, 3
      %s226 = scalar_select %p225, %s224, 3
      %s227 = smul.addr %s226, 2
      %s228 = smul.addr %s227, 4
      %s229 = scalar_lea.vmem %s3, %s228
      %s230 = sld [smem:[#allocation3 + %s21]]
      %p231 = scmp.lt.s32.totalorder %s21, 3
      %s232 = scalar_select %p231, %s21, 3
      %s233 = smul.addr %s232, 2
      %s234 = smul.addr %s233, 4
      %s235 = scalar_lea.vmem %s4, %s234
      %v236 = vld [vmem:[%s216] sm:$0x3]
      %v237 = vld [vmem:[%s223] sm:$0xff]
      %v238 = vld [vmem:[%s229] sm:$0xff]
      %v239 = vsub.f32 1.0, %v236
      %v241 = vlaneseq
      %v242 = vshrl.u32 %v241, 7
      %v243 = vsub.s32 0, %v242
      %v244 = vrot.slane %v239, %v243
      %v245 = vlaneseq
      %v246 = vshrl.u32 %v245, 7
      %v247 = vsub.s32 1, %v246
      %v248 = vrot.slane %v239, %v247
      %v252 = vcombine.high %v237, %v237
      %v254 = vmul.f32 %v244, %v237
      %v255 = vmul.f32 %v248, %v252
      %v257 = vlaneseq
      %v258 = vshrl.u32 %v257, 7
      %v259 = vsub.s32 0, %v258
      %v260 = vrot.slane %v236, %v259
      %v261 = vlaneseq
      %v262 = vshrl.u32 %v261, 7
      %v263 = vsub.s32 1, %v262
      %v264 = vrot.slane %v236, %v263
      %v268 = vcombine.high %v238, %v238
      %v270 = vmul.f32 %v260, %v238
      %v271 = vmul.f32 %v264, %v268
      %v272 = vadd.f32 %v254, %v270
      %v273 = vadd.f32 %v255, %v271
      %v276 = vcombine.low %v272, %v273
      %278 = vst [vmem:[%s235] sm:$0xff] %v276
      %p279 = scmp.lt.s32.totalorder %s21, 3
      %s280 = scalar_select %p279, %s21, 3
      %s281 = smul.addr %s280, 2
      %s282 = smul.addr %s281, 4
      %s283 = scalar_lea.vmem %s4, %s282
      // Predicated region
      $region33: #{_apply_mixup_cutmix.2} parent=31 // pred_check
        %p284 = pneg %p123
      $region34: #{_apply_mixup_cutmix.2} parent=31 // pred_check_branch
        %286 = sbr.rel (%p284) target = $region36
      $region35: #{_apply_mixup_cutmix.2} parent=31 // pred_region
        _
      $region36: #{_apply_mixup_cutmix.2} parent=31 // pred_fallthru
        _
    $region32: #{_apply_mixup_cutmix.2} parent=5 // pred_fallthru
      _
    %p287 = scmp.le.s32.totalorder 2, %s16
    // Predicated region
    $region37: #{_apply_mixup_cutmix.2} parent=5 // pred_check
      %p288 = pneg %p287
    $region38: #{_apply_mixup_cutmix.2} parent=5 // pred_check_branch
      %290 = sbr.rel (%p288) target = $region40
    $region39: #{_apply_mixup_cutmix.2} parent=5 // pred_region
      %s291 = ssub.s32 %s16, 2
      // Predicated region
      $region41: #{_apply_mixup_cutmix.2} parent=39 // pred_check
        %p292 = pneg %p129
      $region42: #{_apply_mixup_cutmix.2} parent=39 // pred_check_branch
        %294 = sbr.rel (%p292) target = $region44
      $region43: #{_apply_mixup_cutmix.2} parent=39 // pred_region
        %p295 = scmp.lt.s32.totalorder %s22, 3
        %s296 = scalar_select %p295, %s22, 3
        %s297 = smul.addr %s296, 2
        %s298 = smul.addr %s297, 4
        %s299 = scalar_lea.vmem %s4, %s298
      $region44: #{_apply_mixup_cutmix.2} parent=39 // pred_fallthru
        _
    $region40: #{_apply_mixup_cutmix.2} parent=5 // pred_fallthru
      _
  $region6: #{_apply_mixup_cutmix.2} parent=0 // loop_footer
    %s20 = sadd.s32 1, %s16
  $region7: #{_apply_mixup_cutmix.2} parent=0 // loop_footer_branch
    %15 = sbr.rel target = $region3
  $region8: #{_apply_mixup_cutmix.2} parent=0 // loop_exit
    _

</llo_original>
